<compile_context>
chip_gen: v7x
topology: tpu7x:2x2x1
jax: 0.10.0
libtpu: 0.0.40
codegen_flags: <defaults>
</compile_context>

<pallas_src>
import jax
import jax.numpy as jnp
from jax.experimental import pallas as pl
from jax.experimental.pallas import tpu as pltpu


def _cdiv(a, b):
    return -(-a // b)


def _round_up(a, b):
    return _cdiv(a, b) * b


def _sublane(dtype):
    itemsize = jnp.dtype(dtype).itemsize
    if itemsize >= 4:
        return 8
    if itemsize == 2:
        return 16
    return 32


def _tile_config():
    """Return (tile_byte_budget, vmem_limit_bytes_or_None) keyed on TPU generation."""
    try:
        kind = jax.devices()[0].device_kind.lower()
    except Exception:
        kind = ""
    if "v7" in kind or "7x" in kind:
        # 8 MiB tiles -> ~32 MiB resident (double-buffered in+out); raise scoped
        # VMEM limit (default 32 MiB, physical 64 MiB -> leave headroom).
        return 8 << 20, 48 << 20
    if "v6" in kind:
        # 4 MiB tiles -> ~16 MiB resident, fits v6e's 32 MiB default scoped VMEM.
        return 4 << 20, None
    # v5e / unknown: 2 MiB tiles -> ~8 MiB resident, safe under 16 MiB default.
    return 2 << 20, None


def _gating_kernel(scale_ref, x_ref, o_ref):
    # scale_ref: (2,) f32 in SMEM -> [alpha, alpha*beta] (offset hoisted in wrapper).
    a = scale_ref[0]
    s = scale_ref[1]
    y = jnp.clip(a * x_ref[...].astype(jnp.float32) - s, 0.0, 1.0)
    o_ref[...] = y.astype(o_ref.dtype)


def _choose_tile_rows(R, C, itemsize, sub, budget_bytes, total_bytes):
    c_pad = _round_up(C, 128)  # VMEM lane padding for ragged last dims
    tile_rows = max(sub, (budget_bytes // (c_pad * itemsize)) // sub * sub)
    # Megacore (v7x): guarantee >= 2 grid steps for non-trivial inputs so both
    # TensorCores stream; keep tiny inputs at a single block (no per-step overhead).
    if total_bytes > (1 << 20) and R > sub:
        tile_rows = min(tile_rows, max(sub, _round_up(_cdiv(R, 2), sub)))
    if tile_rows >= R:
        tile_rows = R  # full-extent rows: single block, always a legal block shape
    return tile_rows


def _run_2d(x2d, scale, tile_rows, vmem_limit, n_valid):
    R, C = x2d.shape
    itemsize = jnp.dtype(x2d.dtype).itemsize
    grid = (_cdiv(R, tile_rows),)
    cp = dict(dimension_semantics=("parallel",))
    if vmem_limit is not None:
        cp["vmem_limit_bytes"] = vmem_limit
    return pl.pallas_call(
        _gating_kernel,
        out_shape=jax.ShapeDtypeStruct((R, C), x2d.dtype),
        grid=grid,
        in_specs=[
            pl.BlockSpec(memory_space=pltpu.SMEM),            # [alpha, alpha*beta]
            pl.BlockSpec((tile_rows, C), lambda i: (i, 0)),
        ],
        out_specs=pl.BlockSpec((tile_rows, C), lambda i: (i, 0)),
        compiler_params=pltpu.CompilerParams(**cp),
        cost_estimate=pl.CostEstimate(
            flops=2 * n_valid,
            transcendentals=0,
            bytes_accessed=2 * n_valid * itemsize,
        ),
    )(scale, x2d)


def learnable_relatedness_gating(relness, alpha, beta):
    """clamp(alpha * relness - alpha * beta, 0, 1). alpha/beta: shape-(1,) params."""
    orig_shape = relness.shape
    dtype = relness.dtype
    total = int(relness.size)

    if total == 0:
        return relness  # empty-input guard

    a32 = jnp.asarray(alpha, jnp.float32).reshape(-1)[0]
    b32 = jnp.asarray(beta, jnp.float32).reshape(-1)[0]
    scale = jnp.stack([a32, a32 * b32])  # (2,) f32 -> SMEM

    itemsize = jnp.dtype(dtype).itemsize
    sub = _sublane(dtype)
    budget_bytes, vmem_limit = _tile_config()
    total_bytes = total * itemsize

    # ---- choose a copy-free 2D view (no jnp.pad / output slice on hot paths) ----
    x2d = None
    if total % 128 == 0:
        # Path A: lane-dense flatten; reshape of contiguous data is free.
        C = 128
        for c in (1024, 512, 256, 128):
            if total % c == 0:
                C = c
                break
        x2d = relness.reshape(total // C, C)
    elif relness.ndim >= 2:
        # Path B: collapse leading dims, keep the (possibly ragged) last dim.
        # Block cols == full array dim, so no 128-divisibility and no padding needed.
        C = orig_shape[-1]
        if _round_up(C, 128) * sub * itemsize <= budget_bytes:
            x2d = relness.reshape(-1, C)

    if x2d is not None:
        R, C = x2d.shape
        tile_rows = _choose_tile_rows(R, C, itemsize, sub, budget_bytes, total_bytes)
        out2d = _run_2d(x2d, scale, tile_rows, vmem_limit, total)
        return out2d.reshape(orig_shape)

    # Path C (rare): ragged 1-D input or pathologically wide ragged last dim.
    # Pad only to the next lane multiple (<= 127 elements of padding).
    # TODO(synk): split into a divisible body call + tiny tail call to remove this
    #             pad/slice copy for very large ragged 1-D inputs.
    padded = _round_up(total, 128)
    flat = jnp.pad(relness.reshape(-1), (0, padded - total))
    R, C = padded // 128, 128
    tile_rows = _choose_tile_rows(R, C, itemsize, sub, budget_bytes, total_bytes)
    out2d = _run_2d(flat.reshape(R, C), scale, tile_rows, vmem_limit, total)
    return out2d.reshape(-1)[:total].reshape(orig_shape)


if __name__ == "__main__":
    key = jax.random.PRNGKey(0)

    # Parameter init mirroring LEARNABLE_SCALING_WEIGHT = (2.0, 0.5).
    alpha = jnp.array([2.0], dtype=jnp.float32)
    beta = jnp.array([0.5], dtype=jnp.float32)

    def ref_fn(x):
        return jnp.clip(alpha[0] * x - alpha[0] * beta[0], 0.0, 1.0)

    k1, k2, k3, k4 = jax.random.split(key, 4)

    # (1) Common divisible relatedness matrix (Path A, single block, no pad/slice).
    x1 = jax.random.uniform(k1, (64, 128), dtype=jnp.float32)
    o1 = jax.block_until_ready(learnable_relatedness_gating(x1, alpha, beta))
    assert o1.shape == x1.shape and jnp.allclose(o1, ref_fn(x1), atol=1e-6), "mismatch (64x128)"

    # (2) Ragged 2-D matrix (Path B: no pad, no slice; masked edge stores only).
    x2 = jax.random.uniform(k2, (37, 51), dtype=jnp.float32) * 2.0 - 0.5
    o2 = jax.block_until_ready(learnable_relatedness_gating(x2, alpha, beta))
    assert o2.shape == x2.shape and jnp.allclose(o2, ref_fn(x2), atol=1e-6), "mismatch (37x51)"

    # (3) Larger input: multi-step parallel grid with a partial edge block (Path A).
    x3 = jax.random.uniform(k3, (300, 1024), dtype=jnp.float32) * 2.0 - 0.5
    o3 = jax.block_until_ready(learnable_relatedness_gating(x3, alpha, beta))
    assert o3.shape == x3.shape and jnp.allclose(o3, ref_fn(x3), atol=1e-6), "mismatch (300x1024)"

    # (4) Ragged 1-D fallback (Path C, minimal pad to next multiple of 128).
    x4 = jax.random.uniform(k4, (1000,), dtype=jnp.float32) * 2.0 - 0.5
    o4 = jax.block_until_ready(learnable_relatedness_gating(x4, alpha, beta))
    assert o4.shape == x4.shape and jnp.allclose(o4, ref_fn(x4), atol=1e-6), "mismatch (1000,)"

    print("KERNEL_OK")
</pallas_src>

<mosaic_0001>
module attributes {stable_mosaic.version = 11 : i64} {
  func.func @_gating_kernel(%arg0: i32, %arg1: memref<2xf32, #tpu.memory_space<smem>>, %arg2: memref<8x1024xf32, #tpu.memory_space<vmem>>, %arg3: memref<8x1024xf32, #tpu.memory_space<vmem>>) attributes {dimension_semantics = [#tpu.dimension_semantics<parallel>], iteration_bounds = array<i64: 1>, scalar_prefetch = 0 : i64, scratch_operands = 0 : i64, tpu.core_type = #tpu.core_type<tc>, window_params = [{transform_indices = @transform_0, window_bounds = array<i64: 2>}, {transform_indices = @transform_1, window_bounds = array<i64: 8, 1024>}, {transform_indices = @transform_2, window_bounds = array<i64: 8, 1024>}]} {
    %c0 = arith.constant 0 : index
    %0 = memref.load %arg1[%c0] : memref<2xf32, #tpu.memory_space<smem>>
    %c1 = arith.constant 1 : index
    %1 = memref.load %arg1[%c1] : memref<2xf32, #tpu.memory_space<smem>>
    %c0_0 = arith.constant 0 : index
    %c0_1 = arith.constant 0 : index
    %2 = vector.load %arg2[%c0_0, %c0_1] : memref<8x1024xf32, #tpu.memory_space<vmem>>, vector<8x1024xf32>
    %3 = vector.broadcast %0 : f32 to vector<8x1024xf32>
    %4 = arith.mulf %3, %2 : vector<8x1024xf32>
    %5 = vector.broadcast %1 : f32 to vector<8x1024xf32>
    %6 = arith.subf %4, %5 : vector<8x1024xf32>
    %cst = arith.constant 0.000000e+00 : f32
    %cst_2 = arith.constant 1.000000e+00 : f32
    %7 = vector.broadcast %cst : f32 to vector<8x1024xf32>
    %8 = arith.maximumf %7, %6 : vector<8x1024xf32>
    %9 = vector.broadcast %cst_2 : f32 to vector<8x1024xf32>
    %10 = arith.minimumf %9, %8 : vector<8x1024xf32>
    %c0_3 = arith.constant 0 : index
    %c0_4 = arith.constant 0 : index
    %11 = vector.load %arg3[%c0_3, %c0_4] : memref<8x1024xf32, #tpu.memory_space<vmem>>, vector<8x1024xf32>
    tpu.vector_store %arg3[%c0_3, %c0_4], %10 {strides = array<i32>} : memref<8x1024xf32, #tpu.memory_space<vmem>>, vector<8x1024xf32>,
    return
  }
  func.func @transform_0(%arg0: i32) -> i32 {
    %c0_i32 = arith.constant 0 : i32
    %c0_i32_0 = arith.constant 0 : i32
    return %c0_i32 : i32
  }
  func.func @transform_1(%arg0: i32) -> (i32, i32) {
    %c0_i32 = arith.constant 0 : i32
    %c0_i32_0 = arith.constant 0 : i32
    return %arg0, %c0_i32 : i32, i32
  }
  func.func @transform_2(%arg0: i32) -> (i32, i32) {
    %c0_i32 = arith.constant 0 : i32
    %c0_i32_0 = arith.constant 0 : i32
    return %arg0, %c0_i32 : i32, i32
  }
}

</mosaic_0001>

<llo_original>
// kernel: tpu_custom_call.1
$region0: #{tpu_custom_call.1}
  #allocation0 [shape = 'u32[]', space=smem, size = 0x4, offset = 0x4, fixed_abs, tag = 'smem constant byte address 0x4 - core index']
  #allocation1 [shape = 'u32[144,128]{1,0:T(1,128)}', space=vmem, size = 0x12000, scoped, tag = 'internal scratch']
  %s0 = inlined_call_operand.hbm [shape: f32[2], index: 0, kind: input, shape index: {}]
  %s1 = inlined_call_operand.hbm [shape: f32[8,1024], index: 1, kind: input, shape index: {}]
  %s2 = inlined_call_operand.hbm [shape: f32[8,1024], index: 2, kind: output, shape index: {}]
  %s3 = sld [smem:[#allocation0]]
  $region26: #{tpu_custom_call.1} parent=0
    _
  %s5 = ssub.s32 1, %s3
  %s6 = scalar_select 0, %s5, %s3
  $region1: #{tpu_custom_call.1} parent=0
    #allocation2 [shape = 'u8[512]{0}', space=smem, size = 0x200, scoped, tag = 'input window, operand 0, single buffered']
    #allocation3 [shape = 's32[1]{0}', space=sflag, size = 0x4, scoped, tag = 'scoped memory for tpu_custom_call.1']
    #allocation4 [shape = 's32[1]{0}', space=sflag, size = 0x4, scoped, tag = 'scoped memory for tpu_custom_call.1']
    #allocation5 [shape = 's32[1]{0}', space=sflag, size = 0x4, scoped, tag = 'scoped memory for tpu_custom_call.1']
    #allocation6 [shape = 'u8[32768]{0}', space=vmem, size = 0x8000, scoped, tag = 'input window, operand 1, single buffered']
    #allocation7 [shape = 'u8[32768]{0}', space=vmem, size = 0x8000, scoped, tag = 'output window, operand 0, single buffered']
    %7 = vsyncpa [#allocation5], 0
    %8 = vsyncpa [#allocation3], 0
    %9 = vsyncpa [#allocation4], 0
    // Predicated region
    $region2: #{tpu_custom_call.1} parent=1 // pred_check
      _
    $region3: #{tpu_custom_call.1} parent=1 // pred_check_branch
      %11 = sbr.rel (0) target = $region5
    $region4: #{tpu_custom_call.1} parent=1 // pred_region
      %s13 = ssub.s32 16, 16
      %14 = vsyncadd [#allocation5], %s13
      %17 = dma.hbm_to_smem %s0, 16, [#allocation2], [#allocation5]
    $region5: #{tpu_custom_call.1} parent=1 // pred_fallthru
      _
    // Predicated region
    $region6: #{tpu_custom_call.1} parent=1 // pred_check
      _
    $region7: #{tpu_custom_call.1} parent=1 // pred_check_branch
      %19 = sbr.rel (0) target = $region9
    $region8: #{tpu_custom_call.1} parent=1 // pred_region
      %s21 = ssub.s32 1024, 1024
      %22 = vsyncadd [#allocation3], %s21
      %s24 = sshll.u32 [#allocation6], 4
      %s25 = int_to_ptr.vmem [resolvable:$true] %s24
      %27 = dma.hbm_to_vmem [thread:$0]  %s1, 1024, %s25, [#allocation3]
    $region9: #{tpu_custom_call.1} parent=1 // pred_fallthru
      _
    // Predicated region
    $region10: #{tpu_custom_call.1} parent=1 // pred_check
      _
    $region11: #{tpu_custom_call.1} parent=1 // pred_check_branch
      %29 = sbr.rel (0) target = $region13
    $region12: #{tpu_custom_call.1} parent=1 // pred_region
      %30 = dma.done [#allocation5], 16
    $region13: #{tpu_custom_call.1} parent=1 // pred_fallthru
      _
    // Predicated region
    $region14: #{tpu_custom_call.1} parent=1 // pred_check
      _
    $region15: #{tpu_custom_call.1} parent=1 // pred_check_branch
      %32 = sbr.rel (0) target = $region17
    $region16: #{tpu_custom_call.1} parent=1 // pred_region
      %33 = dma.done [#allocation3], 1024
    $region17: #{tpu_custom_call.1} parent=1 // pred_fallthru
      _
    %34 = sfence
    %s35 = sld [smem:[#allocation2]]
    %s36 = sld [smem:[#allocation2 + $0x1]]
    %v37 = vld [vmem:[#allocation6] sm:$0xff]
    %v38 = vld [vmem:[#allocation6 + $0x8] sm:$0xff]
    %v39 = vld [vmem:[#allocation6 + $0x10] sm:$0xff]
    %v40 = vld [vmem:[#allocation6 + $0x18] sm:$0xff]
    %v41 = vld [vmem:[#allocation6 + $0x20] sm:$0xff]
    %v42 = vld [vmem:[#allocation6 + $0x28] sm:$0xff]
    %v43 = vld [vmem:[#allocation6 + $0x30] sm:$0xff]
    %v44 = vld [vmem:[#allocation6 + $0x38] sm:$0xff]
    %v45 = vstv %s35
    %v46 = vmul.f32 %v45, %v37
    %v47 = vmul.f32 %v45, %v38
    %v48 = vmul.f32 %v45, %v39
    %v49 = vmul.f32 %v45, %v40
    %v50 = vmul.f32 %v45, %v41
    %v51 = vmul.f32 %v45, %v42
    %v52 = vmul.f32 %v45, %v43
    %v53 = vmul.f32 %v45, %v44
    %v54 = vstv %s36
    %v55 = vsub.f32 %v46, %v54
    %v56 = vsub.f32 %v47, %v54
    %v57 = vsub.f32 %v48, %v54
    %v58 = vsub.f32 %v49, %v54
    %v59 = vsub.f32 %v50, %v54
    %v60 = vsub.f32 %v51, %v54
    %v61 = vsub.f32 %v52, %v54
    %v62 = vsub.f32 %v53, %v54
    %v63 = vmax.f32 %v55, 0.0
    %v64 = vmax.f32 %v56, 0.0
    %v65 = vmax.f32 %v57, 0.0
    %v66 = vmax.f32 %v58, 0.0
    %v67 = vmax.f32 %v59, 0.0
    %v68 = vmax.f32 %v60, 0.0
    %v69 = vmax.f32 %v61, 0.0
    %v70 = vmax.f32 %v62, 0.0
    %v71 = vmin.f32 %v63, 1.0
    %v72 = vmin.f32 %v64, 1.0
    %v73 = vmin.f32 %v65, 1.0
    %v74 = vmin.f32 %v66, 1.0
    %v75 = vmin.f32 %v67, 1.0
    %v76 = vmin.f32 %v68, 1.0
    %v77 = vmin.f32 %v69, 1.0
    %v78 = vmin.f32 %v70, 1.0
    %79 = vst [vmem:[#allocation7] sm:$0xff] %v71
    %80 = vst [vmem:[#allocation7 + $0x8] sm:$0xff] %v72
    %81 = vst [vmem:[#allocation7 + $0x10] sm:$0xff] %v73
    %82 = vst [vmem:[#allocation7 + $0x18] sm:$0xff] %v74
    %83 = vst [vmem:[#allocation7 + $0x20] sm:$0xff] %v75
    %84 = vst [vmem:[#allocation7 + $0x28] sm:$0xff] %v76
    %85 = vst [vmem:[#allocation7 + $0x30] sm:$0xff] %v77
    %86 = vst [vmem:[#allocation7 + $0x38] sm:$0xff] %v78
    // Predicated region
    $region18: #{tpu_custom_call.1} parent=1 // pred_check
      _
    $region19: #{tpu_custom_call.1} parent=1 // pred_check_branch
      %88 = sbr.rel (0) target = $region21
    $region20: #{tpu_custom_call.1} parent=1 // pred_region
      %s90 = ssub.s32 1024, 1024
      %91 = vsyncadd [#allocation4], %s90
      %s93 = sshll.u32 [#allocation7], 4
      %s94 = int_to_ptr.vmem [resolvable:$true] %s93
      %96 = dma.vmem_to_hbm [thread:$0]  %s94, 1024, %s2, [#allocation4]
    $region21: #{tpu_custom_call.1} parent=1 // pred_fallthru
      _
    // Predicated region
    $region22: #{tpu_custom_call.1} parent=1 // pred_check
      _
    $region23: #{tpu_custom_call.1} parent=1 // pred_check_branch
      %98 = sbr.rel (0) target = $region25
    $region24: #{tpu_custom_call.1} parent=1 // pred_region
      %99 = dma.done [#allocation4], 1024
    $region25: #{tpu_custom_call.1} parent=1 // pred_fallthru
      _
    %100 = vsyncpa [#allocation3], 1
    %101 = vsyncpa [#allocation4], 1
    %102 = vsyncpa [#allocation5], 1

</llo_original>
